<compile_context>
chip_gen: v6e
topology: v6e:2x2x1
jax: 0.10.0
libtpu: 0.0.40
codegen_flags: <defaults>
</compile_context>

<pallas_src>
import functools

import jax
import jax.numpy as jnp
from jax import lax
from jax.experimental import pallas as pl
from jax.experimental.pallas import tpu as pltpu


# ----------------------------------------------------------------------------
# Pallas kernel: decode a (Gb, no, ts) slab (one anchor, Gb batch rows, ts lanes)
# ----------------------------------------------------------------------------
def _yolo_decode_kernel(anch_ref, x_ref, o_ref, *, nx, stride, ts, new_coords,
                        approx_sigmoid):
    a = pl.program_id(0)                                   # anchor index (constant / block)
    s_off = (pl.program_id(2) * ts).astype(jnp.float32)    # spatial lane offset

    x = x_ref[...].astype(jnp.float32)                     # (Gb, no, ts)
    row = lax.broadcasted_iota(jnp.int32, x.shape, 1)      # output channel (0..no-1)
    lanef = lax.broadcasted_iota(jnp.int32, x.shape, 2).astype(jnp.float32) + s_off

    # Grid offsets via float math (no vector int div/mod -> ~5 VPU ops instead of a
    # long integer-divide sequence).  Exact for YOLO-sized grids (values << 2^24).
    gy = jnp.floor((lanef + 0.5) * (1.0 / nx))
    gx = lanef - gy * nx
    r0 = row == 0
    grid_off = jnp.where(r0, gx, gy)                       # consumed only on rows 0/1

    # Anchor (w, h) scalars from SMEM (constant for this block).
    aw = anch_ref[2 * a]
    ah = anch_ref[2 * a + 1]

    is_xy = row < 2
    r2 = row == 2
    is_wh = r2 | (row == 3)

    if new_coords:
        anchor4 = jnp.where(r2, 4.0 * aw, 4.0 * ah)        # scalar 4x folded pre-broadcast
        body = jnp.where(is_wh, x * x * anchor4, x)        # xy rows keep raw x
    else:
        anchor = jnp.where(r2, aw, ah)
        # Single EUP exp over the tile: exp(x) where wh is needed, exp(-x) elsewhere.
        t = jnp.where(is_wh, x, -x)
        e = jnp.exp(t)
        sig = pl.reciprocal(1.0 + e, approx=approx_sigmoid)
        body = jnp.where(is_wh, e * anchor, sig)           # xy rows carry sigmoid(x)

    # Shared epilogue: only rows 0/1 get the grid offset + stride scaling.
    out = jnp.where(is_xy, (body + grid_off) * stride, body)
    o_ref[...] = out.astype(o_ref.dtype)


# ----------------------------------------------------------------------------
# Tiling: big, VMEM-budgeted blocks (~<=2 MB) so the ~0.35 us per-step cost is amortized
# ----------------------------------------------------------------------------
def _choose_tiles(bs, s, no, itemsize, *, na, target_bytes=2 * 1024 * 1024):
    if s % 128 == 0:
        ts = 128
        for cand in range(128, s + 1, 128):
            if s % cand == 0 and no * cand * itemsize <= target_bytes:
                ts = cand
    else:
        # TODO(synk): masked tail tiles / wrapper padding for large non-128-aligned
        # spatial extents; full-extent block is fine for YOLO grid sizes (13x13, 20x20, ...).
        ts = s

    # Group as many batch slabs per block as the byte budget allows.
    gb = bs
    while gb > 1 and (bs % gb != 0 or gb * no * ts * itemsize > target_bytes):
        gb -= 1

    # Keep >= 2 grid steps when possible so both v7x TensorCores get work.
    if na * (bs // gb) * (s // ts) < 2 and gb > 1:
        cand = gb - 1
        while cand > 1 and bs % cand != 0:
            cand -= 1
        gb = cand
    return gb, ts


# ----------------------------------------------------------------------------
# Wrapper (matches YOLOLayer.forward)
# ----------------------------------------------------------------------------
def yolo_layer_forward(x, anchors, img_size, num_classes, *, new_coords=False,
                       training=False, dense_output=False, approx_sigmoid=True):
    """x: (bs, na*(num_classes+5), ny, nx); anchors: (na, 2) pixel anchors.

    eval  -> (bs, na*ny*nx, num_classes+5)   decoded (dense_output=False, PyTorch layout)
             (bs, na, num_classes+5, ny, nx) decoded lane-dense (dense_output=True)
    train -> (bs, na, ny, nx, num_classes+5) raw permuted view.
    """
    bs, c, ny, nx = x.shape
    na = anchors.shape[0]
    no = num_classes + 5
    assert c == na * no, (c, na, no)
    stride = img_size // ny

    if training:
        # Training path is a pure view+permute (no decode) -> plain JAX layout op.
        return x.reshape(bs, na, no, ny, nx).transpose(0, 1, 3, 4, 2)

    s = ny * nx
    itemsize = x.dtype.itemsize
    gb, ts = _choose_tiles(bs, s, no, itemsize, na=na)

    # (bs, na*no, ny, nx) -> (bs, na, no, ny*nx): pure reshape, native dtype (no upcast).
    xr = x.reshape(bs, na, no, s)
    anch_flat = anchors.reshape(-1).astype(jnp.float32)    # tiny (2*na,) SMEM operand

    kernel = functools.partial(
        _yolo_decode_kernel, nx=nx, stride=float(stride), ts=ts,
        new_coords=new_coords, approx_sigmoid=approx_sigmoid)

    n_elem = bs * na * no * s
    cost = pl.CostEstimate(
        flops=12 * n_elem,
        transcendentals=0 if new_coords else n_elem,
        bytes_accessed=2 * n_elem * itemsize)

    blk = (gb, pl.Squeezed(), no, ts)                      # kernel sees (gb, no, ts)
    idx = lambda a, b, si: (b, a, 0, si)

    out = pl.pallas_call(
        kernel,
        out_shape=jax.ShapeDtypeStruct((bs, na, no, s), x.dtype),
        grid=(na, bs // gb, s // ts),
        in_specs=[
            pl.BlockSpec(memory_space=pltpu.MemorySpace.SMEM),   # anchors (whole, SMEM)
            pl.BlockSpec(blk, idx),                              # prediction block
        ],
        out_specs=pl.BlockSpec(blk, idx),
        compiler_params=pltpu.CompilerParams(
            dimension_semantics=("parallel", "parallel", "parallel")),
        cost_estimate=cost,
    )(anch_flat, xr)

    if dense_output:
        # Lane-dense result; downstream (multi-head concat / NMS prep) should absorb
        # the layout change here instead of paying an extra HBM pass per head.
        return out.reshape(bs, na, no, ny, nx)

    # PyTorch API layout (bs, na*ny*nx, no): single wrapper transpose (layout plumbing
    # only; kernel stores stay unmasked & lane-dense).
    return out.transpose(0, 1, 3, 2).reshape(bs, na * s, no)


# ----------------------------------------------------------------------------
# Pure-JAX reference (mirrors the PyTorch forward) for correctness checking
# ----------------------------------------------------------------------------
def yolo_layer_reference(x, anchors, img_size, num_classes, *, new_coords=False):
    bs, c, ny, nx = x.shape
    na = anchors.shape[0]
    no = num_classes + 5
    stride = img_size // ny
    xp = x.reshape(bs, na, no, ny, nx).transpose(0, 1, 3, 4, 2).astype(jnp.float32)
    yv, xv = jnp.meshgrid(jnp.arange(ny), jnp.arange(nx), indexing="ij")
    grid = jnp.stack((xv, yv), axis=2).reshape(1, 1, ny, nx, 2).astype(jnp.float32)
    ag = anchors.reshape(1, na, 1, 1, 2).astype(jnp.float32)
    if new_coords:
        xy = (xp[..., 0:2] + grid) * stride
        wh = xp[..., 2:4] ** 2 * (4 * ag)
        rest = xp[..., 4:]
    else:
        xy = (jax.nn.sigmoid(xp[..., 0:2]) + grid) * stride
        wh = jnp.exp(xp[..., 2:4]) * ag
        rest = jax.nn.sigmoid(xp[..., 4:])
    return jnp.concatenate([xy, wh, rest], axis=-1).reshape(bs, -1, no)


# ----------------------------------------------------------------------------
if __name__ == "__main__":
    key = jax.random.PRNGKey(0)

    num_classes = 2
    no = num_classes + 5
    anchors_list = [(10, 13), (16, 30), (33, 23)]
    na = len(anchors_list)
    bs, ny, nx = 2, 16, 16
    img_size = 64                     # stride = 4

    anchors = jnp.asarray(anchors_list, jnp.float32)
    x = jax.random.normal(key, (bs, na * no, ny, nx), jnp.float32)

    ok = True
    # (new_coords, approx_sigmoid, tolerance)
    configs = [(False, True, 1e-2), (False, False, 1e-5), (True, True, 1e-5)]
    for nc_flag, approx, tol in configs:
        fwd = jax.jit(functools.partial(
            yolo_layer_forward, img_size=img_size, num_classes=num_classes,
            new_coords=nc_flag, approx_sigmoid=approx))
        out = jax.block_until_ready(fwd(x, anchors))
        assert out.shape == (bs, na * ny * nx, no), out.shape
        ref = yolo_layer_reference(x, anchors, img_size, num_classes, new_coords=nc_flag)
        ok &= bool(jnp.all(jnp.isfinite(out)))
        ok &= bool(jnp.allclose(out, ref, rtol=tol, atol=tol))

    # Lane-dense output path (no trailing transpose) must match the API layout.
    dense = jax.block_until_ready(jax.jit(functools.partial(
        yolo_layer_forward, img_size=img_size, num_classes=num_classes,
        new_coords=False, dense_output=True))(x, anchors))
    api = dense.reshape(bs, na, no, ny * nx).transpose(0, 1, 3, 2).reshape(bs, -1, no)
    ok &= bool(jnp.allclose(api,
                            yolo_layer_reference(x, anchors, img_size, num_classes),
                            rtol=1e-2, atol=1e-2))

    assert ok
    print("KERNEL_OK")
</pallas_src>

<mosaic_0001>
module attributes {stable_mosaic.version = 11 : i64} {
  func.func @_yolo_decode_kernel(%arg0: i32, %arg1: i32, %arg2: i32, %arg3: memref<6xf32, #tpu.memory_space<smem>>, %arg4: memref<2x1x7x256xf32, #tpu.memory_space<vmem>>, %arg5: memref<2x1x7x256xf32, #tpu.memory_space<vmem>>) attributes {dimension_semantics = [#tpu.dimension_semantics<parallel>, #tpu.dimension_semantics<parallel>, #tpu.dimension_semantics<parallel>], iteration_bounds = array<i64: 3, 1, 1>, scalar_prefetch = 0 : i64, scratch_operands = 0 : i64, tpu.core_type = #tpu.core_type<tc>, window_params = [{transform_indices = @transform_0, window_bounds = array<i64: 6>}, {transform_indices = @transform_1, window_bounds = array<i64: 2, 1, 7, 256>}, {transform_indices = @transform_2, window_bounds = array<i64: 2, 1, 7, 256>}]} {
    %c256_i32 = arith.constant 256 : i32
    %0 = arith.muli %arg2, %c256_i32 : i32
    %1 = arith.sitofp %0 : i32 to f32
    %c0 = arith.constant 0 : index
    %c0_0 = arith.constant 0 : index
    %c0_1 = arith.constant 0 : index
    %c0_2 = arith.constant 0 : index
    %2 = vector.load %arg4[%c0, %c0_0, %c0_1, %c0_2] : memref<2x1x7x256xf32, #tpu.memory_space<vmem>>, vector<2x1x7x256xf32>
    %3 = vector.shape_cast %2 : vector<2x1x7x256xf32> to vector<2x7x256xf32>
    %4 = tpu.iota {dimensions = array<i32: 1>} : vector<2x7x256xi32>
    %5 = tpu.iota {dimensions = array<i32: 2>} : vector<2x7x256xi32>
    %6 = arith.sitofp %5 : vector<2x7x256xi32> to vector<2x7x256xf32>
    %7 = vector.broadcast %1 : f32 to vector<2x7x256xf32>
    %8 = arith.addf %6, %7 : vector<2x7x256xf32>
    %cst = arith.constant 5.000000e-01 : f32
    %9 = vector.broadcast %cst : f32 to vector<2x7x256xf32>
    %10 = arith.addf %8, %9 : vector<2x7x256xf32>
    %cst_3 = arith.constant 6.250000e-02 : f32
    %11 = vector.broadcast %cst_3 : f32 to vector<2x7x256xf32>
    %12 = arith.mulf %10, %11 : vector<2x7x256xf32>
    %13 = math.floor %12 : vector<2x7x256xf32>
    %cst_4 = arith.constant 1.600000e+01 : f32
    %14 = vector.broadcast %cst_4 : f32 to vector<2x7x256xf32>
    %15 = arith.mulf %13, %14 : vector<2x7x256xf32>
    %16 = arith.subf %8, %15 : vector<2x7x256xf32>
    %c0_i32 = arith.constant 0 : i32
    %17 = vector.broadcast %c0_i32 : i32 to vector<2x7x256xi32>
    %18 = arith.cmpi eq, %4, %17 : vector<2x7x256xi32>
    %19 = arith.select %18, %16, %13 : vector<2x7x256xi1>, vector<2x7x256xf32>
    %c2_i32 = arith.constant 2 : i32
    %20 = arith.muli %c2_i32, %arg0 : i32
    %21 = arith.index_cast %20 : i32 to index
    %22 = memref.load %arg3[%21] : memref<6xf32, #tpu.memory_space<smem>>
    %c2_i32_5 = arith.constant 2 : i32
    %23 = arith.muli %c2_i32_5, %arg0 : i32
    %c1_i32 = arith.constant 1 : i32
    %24 = arith.addi %23, %c1_i32 : i32
    %25 = arith.index_cast %24 : i32 to index
    %26 = memref.load %arg3[%25] : memref<6xf32, #tpu.memory_space<smem>>
    %c2_i32_6 = arith.constant 2 : i32
    %27 = vector.broadcast %c2_i32_6 : i32 to vector<2x7x256xi32>
    %28 = arith.cmpi slt, %4, %27 : vector<2x7x256xi32>
    %c2_i32_7 = arith.constant 2 : i32
    %29 = vector.broadcast %c2_i32_7 : i32 to vector<2x7x256xi32>
    %30 = arith.cmpi eq, %4, %29 : vector<2x7x256xi32>
    %c3_i32 = arith.constant 3 : i32
    %31 = vector.broadcast %c3_i32 : i32 to vector<2x7x256xi32>
    %32 = arith.cmpi eq, %4, %31 : vector<2x7x256xi32>
    %33 = arith.ori %30, %32 : vector<2x7x256xi1>
    %34 = vector.broadcast %22 : f32 to vector<2x7x256xf32>
    %35 = vector.broadcast %26 : f32 to vector<2x7x256xf32>
    %36 = arith.select %30, %34, %35 : vector<2x7x256xi1>, vector<2x7x256xf32>
    %cst_8 = arith.constant 0.000000e+00 : f32
    %37 = vector.broadcast %cst_8 : f32 to vector<2x7x256xf32>
    %38 = arith.subf %37, %3 : vector<2x7x256xf32>
    %39 = arith.select %33, %3, %38 : vector<2x7x256xi1>, vector<2x7x256xf32>
    %40 = math.exp %39 : vector<2x7x256xf32>
    %cst_9 = arith.constant 1.000000e+00 : f32
    %41 = vector.broadcast %cst_9 : f32 to vector<2x7x256xf32>
    %42 = arith.addf %41, %40 : vector<2x7x256xf32>
    %43 = tpu.reciprocal %42 {approx = true} : vector<2x7x256xf32> -> vector<2x7x256xf32>
    %44 = arith.mulf %40, %36 : vector<2x7x256xf32>
    %45 = arith.select %33, %44, %43 : vector<2x7x256xi1>, vector<2x7x256xf32>
    %46 = arith.addf %45, %19 : vector<2x7x256xf32>
    %cst_10 = arith.constant 4.000000e+00 : f32
    %47 = vector.broadcast %cst_10 : f32 to vector<2x7x256xf32>
    %48 = arith.mulf %46, %47 : vector<2x7x256xf32>
    %49 = arith.select %28, %48, %45 : vector<2x7x256xi1>, vector<2x7x256xf32>
    %c0_11 = arith.constant 0 : index
    %c0_12 = arith.constant 0 : index
    %c0_13 = arith.constant 0 : index
    %c0_14 = arith.constant 0 : index
    %50 = vector.load %arg5[%c0_11, %c0_12, %c0_13, %c0_14] : memref<2x1x7x256xf32, #tpu.memory_space<vmem>>, vector<2x1x7x256xf32>
    %51 = vector.shape_cast %50 : vector<2x1x7x256xf32> to vector<2x7x256xf32>
    %52 = vector.shape_cast %49 : vector<2x7x256xf32> to vector<2x1x7x256xf32>
    tpu.vector_store %arg5[%c0_11, %c0_12, %c0_13, %c0_14], %52 {strides = array<i32>} : memref<2x1x7x256xf32, #tpu.memory_space<vmem>>, vector<2x1x7x256xf32>,
    return
  }
  func.func @transform_0(%arg0: i32, %arg1: i32, %arg2: i32) -> i32 {
    %c0_i32 = arith.constant 0 : i32
    %c0_i32_0 = arith.constant 0 : i32
    return %c0_i32 : i32
  }
  func.func @transform_1(%arg0: i32, %arg1: i32, %arg2: i32) -> (i32, i32, i32, i32) {
    %c0_i32 = arith.constant 0 : i32
    %c0_i32_0 = arith.constant 0 : i32
    return %arg1, %arg0, %c0_i32, %arg2 : i32, i32, i32, i32
  }
  func.func @transform_2(%arg0: i32, %arg1: i32, %arg2: i32) -> (i32, i32, i32, i32) {
    %c0_i32 = arith.constant 0 : i32
    %c0_i32_0 = arith.constant 0 : i32
    return %arg1, %arg0, %c0_i32, %arg2 : i32, i32, i32, i32
  }
}

</mosaic_0001>

<llo_original>
// kernel: yolo_layer_forward.1
$region0: #{yolo_layer_forward.1}
  #allocation0 [shape = 'u32[]', space=smem, size = 0x4, offset = 0x4, fixed_abs, tag = 'smem constant byte address 0x4 - core index']
  #allocation1 [shape = 'u32[144,128]{1,0:T(1,128)}', space=vmem, size = 0x12000, scoped, tag = 'internal scratch']
  %s0 = inlined_call_operand.vmem [shape: f32[6], index: 0, kind: input, shape index: {}]
  %s1 = inlined_call_operand.vmem [shape: f32[2,3,7,256], index: 1, kind: input, shape index: {}]
  %s2 = inlined_call_operand.vmem [shape: f32[2,3,7,256], index: 2, kind: output, shape index: {}]
  %s3 = sld [smem:[#allocation0]]
  $region87: #{yolo_layer_forward.1} parent=0
    _
  %s5 = ssub.s32 1, %s3
  %s6 = scalar_select 0, %s5, %s3
  $region1: #{yolo_layer_forward.1} parent=0
    #allocation2 [shape = 'u8[512]{0}', space=smem, size = 0x200, scoped, tag = 'input window, operand 0, single buffered']
    #allocation3 [shape = 's32[2]{0}', space=sflag, size = 0x8, scoped, tag = 'scoped memory for yolo_layer_forward.1']
    #allocation4 [shape = 'u8[32768]{0}', space=vmem, size = 0x8000, scoped, tag = 'input window, operand 1']
    #allocation5 [shape = 'u8[32768]{0}', space=vmem, size = 0x8000, scoped, tag = 'output window, operand 0']
    %7 = vsyncpa [#allocation3], 0
    loop: start=0, step=1, limit=5
    $region2: #{yolo_layer_forward.1} parent=1 // loop_pre_header
      _
    $region3: #{yolo_layer_forward.1} parent=1 // loop_header
      %s9 = sphi 0, %s13
      %p10 = scmp.ge.s32.totalorder %s9, 5
      %s16 = sphi 0, %s35
      %s17 = sphi 0, %s31
      %s18 = sphi 0, %s27
      %s19 = sphi 0, %s16
      %s20 = sphi 0, %s17
      %s21 = sphi 0, %s18
      %s22 = sphi 0, %s19
      %s23 = sphi 0, %s20
      %s24 = sphi 0, %s21
      %s36 = sphi 0, %s36
      %s38 = sphi 0, %s36
      %s39 = sphi 0, %s38
      %s53 = sphi 0, %s39
      %s63 = sphi 0, %s65
      %s66 = sphi 0, %s63
      %s67 = sphi 0, %s66
      %s83 = sphi 0, %s67
      %s93 = sphi 0, %s95
      %s96 = sphi 0, %s93
      %s97 = sphi 0, %s96
      %s113 = sphi 0, %s97
    $region4: #{yolo_layer_forward.1} parent=1 // loop_header_branch
      %12 = sbr.rel (%p10) target = $region8
    $region5: #{yolo_layer_forward.1} parent=1 // loop_body
      %s14 = ssub.s32 %s9, 1
      %s15 = ssub.s32 %s9, 2
      %s25 = sadd.s32 1, %s18
      %p26 = scmp.ge.s32.totalorder %s25, 1
      %s27 = scalar_select %p26, 0, %s25
      %s28 = sadd.s32 1, %s17
      %s29 = scalar_select %p26, %s28, %s17
      %p30 = scmp.ge.s32.totalorder %s29, 1
      %s31 = scalar_select %p30, 0, %s29
      %s32 = sadd.s32 1, %s16
      %s33 = scalar_select %p30, %s32, %s16
      %p34 = scmp.ge.s32.totalorder %s33, 3
      %s35 = scalar_select %p34, 0, %s33
      %s37 = sadd.s32 %s36, 1
      %p40 = scmp.eq.s32.totalorder %s9, 2
      %p41 = scmp.ne.s32.totalorder %s36, %s38
      %p42 = scmp.eq.s32.totalorder %s9, 0
      %p43 = por %p41, %p42
      %p44 = scmp.ne.s32.totalorder %s36, %s38
      %p45 = scmp.eq.s32.totalorder %s14, 2
      %p46 = por %p44, %p45
      %p47 = scmp.ne.s32.totalorder %s38, %s39
      %p48 = scmp.eq.s32.totalorder %s14, 0
      %p49 = por %p47, %p48
      %p50 = scmp.ne.s32.totalorder %s38, %s39
      %p51 = scmp.eq.s32.totalorder %s15, 2
      %p52 = por %p50, %p51
      %p54 = scmp.ne.s32.totalorder %s39, %s53
      %p55 = scmp.eq.s32.totalorder %s15, 0
      %p56 = por %p54, %p55
      %s57 = ssub.s32 %s17, %s31
      %s58 = ssub.s32 %s16, %s35
      %s59 = sor.u32 %s57, %s58
      %s60 = ssub.s32 %s18, %s27
      %s61 = sor.u32 %s59, %s60
      %p62 = scmp.eq.s32.totalorder %s61, 0
      %s64 = sadd.s32 %s63, 1
      %s65 = scalar_select %p62, %s63, %s64
      %p68 = pneg %p62
      %p69 = scmp.eq.s32.totalorder %s9, 2
      %p70 = por %p68, %p69
      %p71 = scmp.ne.s32.totalorder %s63, %s66
      %p72 = scmp.eq.s32.totalorder %s9, 0
      %p73 = por %p71, %p72
      %p74 = scmp.ne.s32.totalorder %s63, %s66
      %p75 = scmp.eq.s32.totalorder %s14, 2
      %p76 = por %p74, %p75
      %p77 = scmp.ne.s32.totalorder %s66, %s67
      %p78 = scmp.eq.s32.totalorder %s14, 0
      %p79 = por %p77, %p78
      %p80 = scmp.ne.s32.totalorder %s66, %s67
      %p81 = scmp.eq.s32.totalorder %s15, 2
      %p82 = por %p80, %p81
      %p84 = scmp.ne.s32.totalorder %s67, %s83
      %p85 = scmp.eq.s32.totalorder %s15, 0
      %p86 = por %p84, %p85
      %s87 = ssub.s32 %s17, %s31
      %s88 = ssub.s32 %s16, %s35
      %s89 = sor.u32 %s87, %s88
      %s90 = ssub.s32 %s18, %s27
      %s91 = sor.u32 %s89, %s90
      %p92 = scmp.eq.s32.totalorder %s91, 0
      %s94 = sadd.s32 %s93, 1
      %s95 = scalar_select %p92, %s93, %s94
      %p98 = pneg %p92
      %p99 = scmp.eq.s32.totalorder %s9, 2
      %p100 = por %p98, %p99
      %p101 = scmp.ne.s32.totalorder %s93, %s96
      %p102 = scmp.eq.s32.totalorder %s9, 0
      %p103 = por %p101, %p102
      %p104 = scmp.ne.s32.totalorder %s93, %s96
      %p105 = scmp.eq.s32.totalorder %s14, 2
      %p106 = por %p104, %p105
      %p107 = scmp.ne.s32.totalorder %s96, %s97
      %p108 = scmp.eq.s32.totalorder %s14, 0
      %p109 = por %p107, %p108
      %p110 = scmp.ne.s32.totalorder %s96, %s97
      %p111 = scmp.eq.s32.totalorder %s15, 2
      %p112 = por %p110, %p111
      %p114 = scmp.ne.s32.totalorder %s97, %s113
      %p115 = scmp.eq.s32.totalorder %s15, 0
      %p116 = por %p114, %p115
      %p117 = scmp.le.s32.totalorder 1, %s9
      %p118 = scmp.lt.s32.totalorder %s9, 4
      %p119 = pnand %p117, %p118
      %p120 = pneg %p119
      // Predicated region
      $region9: #{yolo_layer_forward.1} parent=5 // pred_check
        _
      $region10: #{yolo_layer_forward.1} parent=5 // pred_check_branch
        %122 = sbr.rel (%p119) target = $region12
      $region11: #{yolo_layer_forward.1} parent=5 // pred_region
        %s123 = ssub.s32 %s9, 1
        // Predicated region
        $region13: #{yolo_layer_forward.1} parent=11 // pred_check
          %p124 = pneg %p49
        $region14: #{yolo_layer_forward.1} parent=11 // pred_check_branch
          %126 = sbr.rel (%p124) target = $region16
        $region15: #{yolo_layer_forward.1} parent=11 // pred_region
          %s128 = ssub.s32 16, 16
          %129 = vsyncadd [#allocation3], %s128
          %s131 = sshll.u32 %s0, 4
          %s132 = int_to_ptr.vmem [resolvable:$true] %s131
          %134 = dma.vmem_to_smem %s132, 16, [#allocation2], [#allocation3]
        $region16: #{yolo_layer_forward.1} parent=11 // pred_fallthru
          _
      $region12: #{yolo_layer_forward.1} parent=5 // pred_fallthru
        _
      %p135 = scmp.lt.s32.totalorder %s9, 3
      // Predicated region
      $region17: #{yolo_layer_forward.1} parent=5 // pred_check
        %p136 = pneg %p135
      $region18: #{yolo_layer_forward.1} parent=5 // pred_check_branch
        %138 = sbr.rel (%p136) target = $region20
      $region19: #{yolo_layer_forward.1} parent=5 // pred_region
        // Predicated region
        $region21: #{yolo_layer_forward.1} parent=19 // pred_check
          %p139 = pneg %p73
        $region22: #{yolo_layer_forward.1} parent=19 // pred_check_branch
          %141 = sbr.rel (%p139) target = $region24
        $region23: #{yolo_layer_forward.1} parent=19 // pred_region
          %s142 = sand.u32 %s63, 1
          %s143 = sand.u32 %s63, 1
          %s144 = smul.addr %s143, 32
          %s145 = scalar_lea.vmem [#allocation4], %s144
          %s146 = smul.u32 2, %s17
          %s147 = smul.u32 2, %s18
          %s148 = smul.addr %s16, 2
          %s149 = sadd.s32 %s147, %s148
          %s150 = smul.addr %s146, 6
          %s151 = sadd.s32 %s149, %s150
          %s152 = smul.addr %s151, 8
          %s153 = scalar_lea.vmem %s1, %s152
          // Predicated region
          $region25: #{yolo_layer_forward.1} parent=23 // pred_check
            _
          $region26: #{yolo_layer_forward.1} parent=23 // pred_check_branch
            %155 = sbr.rel (0) target = $region28
          $region27: #{yolo_layer_forward.1} parent=23 // pred_region
            // Predicated region
            $region29: #{yolo_layer_forward.1} parent=27 // pred_check
              _
            $region30: #{yolo_layer_forward.1} parent=27 // pred_check_branch
              %157 = sbr.rel (0) target = $region32
            $region31: #{yolo_layer_forward.1} parent=27 // pred_region
              loop: start=0, step=1, limit=1
              $region33: #{yolo_layer_forward.1} parent=31 // loop_pre_header
                _
              $region34: #{yolo_layer_forward.1} parent=31 // loop_header
                %s159 = sphi 0, %s163
                %p160 = scmp.ge.s32.totalorder %s159, 1
                %s164 = sphi %s153, %s153
                %s165 = sphi %s145, %s145
              $region35: #{yolo_layer_forward.1} parent=31 // loop_header_branch
                %162 = sbr.rel (%p160) target = $region39
              $region36: #{yolo_layer_forward.1} parent=31 // loop_body
                %v166 = vld [vmem:[%s164] sm:$0xff]
                %167 = vst [vmem:[%s165] sm:$0xff] %v166
                %v168 = vld [vmem:[%s164 + $0x8] sm:$0xff]
                %169 = vst [vmem:[%s165 + $0x8] sm:$0xff] %v168
                %v170 = vld [vmem:[%s164 + $0x30] sm:$0xff]
                %171 = vst [vmem:[%s165 + $0x10] sm:$0xff] %v170
                %v172 = vld [vmem:[%s164 + $0x38] sm:$0xff]
                %173 = vst [vmem:[%s165 + $0x18] sm:$0xff] %v172
              $region37: #{yolo_layer_forward.1} parent=31 // loop_footer
                %s163 = sadd.s32 1, %s159
              $region38: #{yolo_layer_forward.1} parent=31 // loop_footer_branch
                %158 = sbr.rel target = $region34
              $region39: #{yolo_layer_forward.1} parent=31 // loop_exit
                _
            $region32: #{yolo_layer_forward.1} parent=27 // pred_fallthru
              _
            // Predicated region
            $region40: #{yolo_layer_forward.1} parent=27 // pred_check
              _
            $region41: #{yolo_layer_forward.1} parent=27 // pred_check_branch
              %175 = sbr.rel target = $region43
            $region42: #{yolo_layer_forward.1} parent=27 // pred_region
              _
            $region43: #{yolo_layer_forward.1} parent=27 // pred_fallthru
              _
          $region28: #{yolo_layer_forward.1} parent=23 // pred_fallthru
            _
          %176 = vnop
        $region24: #{yolo_layer_forward.1} parent=19 // pred_fallthru
          _
      $region20: #{yolo_layer_forward.1} parent=5 // pred_fallthru
        _
      %p177 = scmp.le.s32.totalorder 1, %s9
      %p178 = scmp.lt.s32.totalorder %s9, 4
      %p179 = pnand %p177, %p178
      %p180 = pneg %p179
      // Predicated region
      $region44: #{yolo_layer_forward.1} parent=5 // pred_check
        _
      $region45: #{yolo_layer_forward.1} parent=5 // pred_check_branch
        %182 = sbr.rel (%p179) target = $region47
      $region46: #{yolo_layer_forward.1} parent=5 // pred_region
        %s183 = ssub.s32 %s9, 1
        // Predicated region
        $region48: #{yolo_layer_forward.1} parent=46 // pred_check
          %p184 = pneg %p49
        $region49: #{yolo_layer_forward.1} parent=46 // pred_check_branch
          %186 = sbr.rel (%p184) target = $region51
        $region50: #{yolo_layer_forward.1} parent=46 // pred_region
          %187 = dma.done [#allocation3], 16
        $region51: #{yolo_layer_forward.1} parent=46 // pred_fallthru
          _
        %s188 = sand.u32 %s66, 1
        %s189 = sand.u32 %s66, 1
        %s190 = smul.addr %s189, 32
        %s191 = scalar_lea.vmem [#allocation4], %s190
        // Predicated region
        $region52: #{yolo_layer_forward.1} parent=46 // pred_check
          %p192 = pneg %p79
        $region53: #{yolo_layer_forward.1} parent=46 // pred_check_branch
          %194 = sbr.rel (%p192) target = $region55
        $region54: #{yolo_layer_forward.1} parent=46 // pred_region
          _
        $region55: #{yolo_layer_forward.1} parent=46 // pred_fallthru
          _
        %195 = sfence
        %p196 = pneg %p49
        %p197 = pneg %p46
        %s198 = sand.u32 %s66, 1
        %s199 = sand.u32 %s66, 1
        %s200 = smul.addr %s199, 32
        %s201 = scalar_lea.vmem [#allocation4], %s200
        %p202 = pneg %p79
        %p203 = pneg %p76
        %p204 = pneg %p109
        %p205 = pneg %p106
        %s206 = sand.u32 %s96, 1
        %s207 = sand.u32 %s96, 1
        %s208 = smul.addr %s207, 32
        %s209 = scalar_lea.vmem [#allocation5], %s208
        %s210 = smul.u32 2, %s20
        %s211 = smul.u32 2, %s21
        %s212 = smul.u32 2, %s20
        %s213 = smul.u32 2, %s21
        %s214 = smul.u32 %s21, 256
        %s215 = scvt.s32.f32 %s214
        %v216 = vld [vmem:[%s191] sm:$0x7f]
        %v217 = vld [vmem:[%s191 + $0x8] sm:$0x7f]
        %v218 = vld [vmem:[%s191 + $0x10] sm:$0x7f]
        %v219 = vld [vmem:[%s191 + $0x18] sm:$0x7f]
        %v220 = vlaneseq
        %v221 = vshrl.u32 %v220, 7
        %v222 = vlaneseq
        %v223 = vand.u32 %v222, 127
        %v224 = vadd.s32 %v223, 128
        %v225 = vcvt.s32.f32 %v223
        %v226 = vcvt.s32.f32 %v224
        %v227 = vstv %s215
        %v228 = vadd.f32 %v225, %v227
        %v229 = vadd.f32 %v226, %v227
        %v230 = vadd.f32 %v228, 0.5
        %v231 = vadd.f32 %v229, 0.5
        %v232 = vmul.f32 %v230, 0.0625
        %v233 = vmul.f32 %v231, 0.0625
        %v234 = vfloor.f32 %v232
        %v235 = vfloor.f32 %v233
        %v236 = vmul.f32 %v234, 16.0
        %v237 = vmul.f32 %v235, 16.0
        %v238 = vsub.f32 %v228, %v236
        %v239 = vsub.f32 %v229, %v237
        %vm240 = vcmp.eq.s32.totalorder %v221, 0
        %v241 = vsel %vm240, %v238, %v234
        %v242 = vsel %vm240, %v239, %v235
        %s243 = smul.u32 %s19, 2
        %s244 = sld [smem:[#allocation2 + %s243]]
        %s245 = sadd.s32 %s243, 1
        %s246 = sld [smem:[#allocation2 + %s245]]
        %vm247 = vcmp.lt.s32.totalorder %v221, 2
        %vm248 = vcmp.eq.s32.totalorder %v221, 2
        %vm249 = vcmp.eq.s32.totalorder %v221, 3
        %vm250 = vmor %vm248, %vm249
        %v251 = vstv %s244
        %v252 = vstv %s246
        %v253 = vsel %vm248, %v251, %v252
        %v254 = vsub.f32 0.0, %v216
        %v255 = vsub.f32 0.0, %v217
        %v256 = vsub.f32 0.0, %v218
        %v257 = vsub.f32 0.0, %v219
        %v258 = vsel %vm250, %v216, %v254
        %v259 = vsel %vm250, %v217, %v255
        %v260 = vsel %vm250, %v218, %v256
        %v261 = vsel %vm250, %v219, %v257
        %v262 = vmul.f32 %v258, 1.442695
        %v263 = vpow.pop %v262
        %v264 = vmul.f32 %v259, 1.442695
        %v265 = vpow.pop %v264
        %v266 = vmul.f32 %v260, 1.442695
        %v267 = vpow.pop %v266
        %v268 = vmul.f32 %v261, 1.442695
        %v269 = vpow.pop %v268
        %v270 = vadd.f32 %v263, 1.0
        %v271 = vadd.f32 %v265, 1.0
        %v272 = vadd.f32 %v267, 1.0
        %v273 = vadd.f32 %v269, 1.0
        %v274 = vrcp.pop %v270
        %v275 = vrcp.pop %v271
        %v276 = vrcp.pop %v272
        %v277 = vrcp.pop %v273
        %v278 = vmul.f32 %v263, %v253
        %v279 = vmul.f32 %v265, %v253
        %v280 = vmul.f32 %v267, %v253
        %v281 = vmul.f32 %v269, %v253
        %v282 = vsel %vm250, %v278, %v274
        %v283 = vsel %vm250, %v279, %v275
        %v284 = vsel %vm250, %v280, %v276
        %v285 = vsel %vm250, %v281, %v277
        %v286 = vadd.f32 %v282, %v241
        %v287 = vadd.f32 %v283, %v242
        %v288 = vadd.f32 %v284, %v241
        %v289 = vadd.f32 %v285, %v242
        %v290 = vmul.f32 %v286, 4.0
        %v291 = vmul.f32 %v287, 4.0
        %v292 = vmul.f32 %v288, 4.0
        %v293 = vmul.f32 %v289, 4.0
        %v294 = vsel %vm247, %v290, %v282
        %v295 = vsel %vm247, %v291, %v283
        %v296 = vsel %vm247, %v292, %v284
        %v297 = vsel %vm247, %v293, %v285
        %298 = vst [vmem:[%s209] sm:$0x7f] %v294
        %299 = vst [vmem:[%s209 + $0x8] sm:$0x7f] %v295
        %300 = vst [vmem:[%s209 + $0x10] sm:$0x7f] %v296
        %301 = vst [vmem:[%s209 + $0x18] sm:$0x7f] %v297
        %s302 = sand.u32 %s96, 1
        %s303 = sand.u32 %s96, 1
        %s304 = smul.addr %s303, 32
        %s305 = scalar_lea.vmem [#allocation5], %s304
        // Predicated region
        $region56: #{yolo_layer_forward.1} parent=46 // pred_check
          %p306 = pneg %p106
        $region57: #{yolo_layer_forward.1} parent=46 // pred_check_branch
          %308 = sbr.rel (%p306) target = $region59
        $region58: #{yolo_layer_forward.1} parent=46 // pred_region
          %s309 = smul.u32 2, %s20
          %s310 = smul.u32 2, %s21
          %s311 = smul.addr %s19, 2
          %s312 = sadd.s32 %s310, %s311
          %s313 = smul.addr %s309, 6
          %s314 = sadd.s32 %s312, %s313
          %s315 = smul.addr %s314, 8
          %s316 = scalar_lea.vmem %s2, %s315
          // Predicated region
          $region60: #{yolo_layer_forward.1} parent=58 // pred_check
            _
          $region61: #{yolo_layer_forward.1} parent=58 // pred_check_branch
            %318 = sbr.rel (0) target = $region63
          $region62: #{yolo_layer_forward.1} parent=58 // pred_region
            // Predicated region
            $region64: #{yolo_layer_forward.1} parent=62 // pred_check
              _
            $region65: #{yolo_layer_forward.1} parent=62 // pred_check_branch
              %320 = sbr.rel (0) target = $region67
            $region66: #{yolo_layer_forward.1} parent=62 // pred_region
              loop: start=0, step=1, limit=1
              $region68: #{yolo_layer_forward.1} parent=66 // loop_pre_header
                _
              $region69: #{yolo_layer_forward.1} parent=66 // loop_header
                %s322 = sphi 0, %s326
                %p323 = scmp.ge.s32.totalorder %s322, 1
                %s327 = sphi %s305, %s305
                %s328 = sphi %s316, %s316
              $region70: #{yolo_layer_forward.1} parent=66 // loop_header_branch
                %325 = sbr.rel (%p323) target = $region74
              $region71: #{yolo_layer_forward.1} parent=66 // loop_body
                %v329 = vld [vmem:[%s327] sm:$0xff]
                %330 = vst [vmem:[%s328] sm:$0xff] %v329
                %v331 = vld [vmem:[%s327 + $0x8] sm:$0xff]
                %332 = vst [vmem:[%s328 + $0x8] sm:$0xff] %v331
                %v333 = vld [vmem:[%s327 + $0x10] sm:$0xff]
                %334 = vst [vmem:[%s328 + $0x30] sm:$0xff] %v333
                %v335 = vld [vmem:[%s327 + $0x18] sm:$0xff]
                %336 = vst [vmem:[%s328 + $0x38] sm:$0xff] %v335
              $region72: #{yolo_layer_forward.1} parent=66 // loop_footer
                %s326 = sadd.s32 1, %s322
              $region73: #{yolo_layer_forward.1} parent=66 // loop_footer_branch
                %321 = sbr.rel target = $region69
              $region74: #{yolo_layer_forward.1} parent=66 // loop_exit
                _
            $region67: #{yolo_layer_forward.1} parent=62 // pred_fallthru
              _
            // Predicated region
            $region75: #{yolo_layer_forward.1} parent=62 // pred_check
              _
            $region76: #{yolo_layer_forward.1} parent=62 // pred_check_branch
              %338 = sbr.rel target = $region78
            $region77: #{yolo_layer_forward.1} parent=62 // pred_region
              _
            $region78: #{yolo_layer_forward.1} parent=62 // pred_fallthru
              _
          $region63: #{yolo_layer_forward.1} parent=58 // pred_fallthru
            _
          %339 = vnop
        $region59: #{yolo_layer_forward.1} parent=46 // pred_fallthru
          _
      $region47: #{yolo_layer_forward.1} parent=5 // pred_fallthru
        _
      %p340 = scmp.le.s32.totalorder 2, %s9
      // Predicated region
      $region79: #{yolo_layer_forward.1} parent=5 // pred_check
        %p341 = pneg %p340
      $region80: #{yolo_layer_forward.1} parent=5 // pred_check_branch
        %343 = sbr.rel (%p341) target = $region82
      $region81: #{yolo_layer_forward.1} parent=5 // pred_region
        %s344 = ssub.s32 %s9, 2
        // Predicated region
        $region83: #{yolo_layer_forward.1} parent=81 // pred_check
          %p345 = pneg %p112
        $region84: #{yolo_layer_forward.1} parent=81 // pred_check_branch
          %347 = sbr.rel (%p345) target = $region86
        $region85: #{yolo_layer_forward.1} parent=81 // pred_region
          %s348 = sand.u32 %s97, 1
          %s349 = sand.u32 %s97, 1
          %s350 = smul.addr %s349, 32
          %s351 = scalar_lea.vmem [#allocation5], %s350
        $region86: #{yolo_layer_forward.1} parent=81 // pred_fallthru
          _
      $region82: #{yolo_layer_forward.1} parent=5 // pred_fallthru
        _
    $region6: #{yolo_layer_forward.1} parent=1 // loop_footer
      %s13 = sadd.s32 1, %s9
    $region7: #{yolo_layer_forward.1} parent=1 // loop_footer_branch
      %8 = sbr.rel target = $region3
    $region8: #{yolo_layer_forward.1} parent=1 // loop_exit
      _
    %352 = vsyncpa [#allocation3], 1
    %s353 = scalar_lea.sflag [#allocation3], 1
    %354 = vsyncpa %s353, 1

</llo_original>
